<compile_context>
chip_gen: v7x
topology: tpu7x:2x2x1
jax: 0.10.0
libtpu: 0.0.40
codegen_flags: <defaults>
</compile_context>

<pallas_src>
import numpy as np

import jax
import jax.numpy as jnp
from jax.experimental import pallas as pl
from jax.experimental.pallas import tpu as pltpu


# --------------------------------------------------------------------------- kernel

def _upsample_block_kernel(prev_ref, cur_ref, nxt_ref, mv_ref, mvp_ref, mvn_ref,
                           mh_ref, o_ref):
    """One (2*TH, 2*W) output row-block of the factor-2 blur upsample.

    prev_ref : (8,  W)     the 8 input rows just above the block (border-clamped)
    cur_ref  : (TH, W)     input rows [hb*TH, hb*TH + TH)
    nxt_ref  : (8,  W)     the 8 input rows just below the block (border-clamped)
    mv_ref   : (2*TH, TH)  vertical polyphase matrix acting on the current rows
    mvp_ref  : (2*TH, 8)   vertical tap of the row above (single entry at [0, 7])
    mvn_ref  : (2*TH, 8)   vertical tap of the row below (single entry at [2*TH-1, 0])
    mh_ref   : (W, 2*W)    horizontal polyphase matrix (filter + upsample + interleave)
    o_ref    : (2*TH, 2*W) output rows [2*hb*TH, 2*hb*TH + 2*TH)
    """
    hb = pl.program_id(1)
    dt = cur_ref.dtype

    # Horizontal pass first (reassociated): contraction over W applied to the TH
    # (+ 2*8 halo) input rows rather than to 2*TH output rows.  Native-dtype MXU
    # operands, f32 accumulation.
    h = jnp.dot(cur_ref[...], mh_ref[...], preferred_element_type=jnp.float32)
    hp = jnp.dot(prev_ref[...], mh_ref[...], preferred_element_type=jnp.float32)
    hn = jnp.dot(nxt_ref[...], mh_ref[...], preferred_element_type=jnp.float32)

    # Vertical pass: row upsample + 4-tap filter folded into small matmuls.  The halo
    # blocks are border-clamped by their index_maps, so their contribution is zeroed
    # at the image border instead (only output row 0 / row 2*TH-1 are affected).
    sp = jnp.where(hb > 0, 1.0, 0.0)
    sn = jnp.where(hb < pl.num_programs(1) - 1, 1.0, 0.0)
    out = jnp.dot(mv_ref[...], h.astype(dt), preferred_element_type=jnp.float32)
    out += sp * jnp.dot(mvp_ref[...], hp.astype(dt), preferred_element_type=jnp.float32)
    out += sn * jnp.dot(mvn_ref[...], hn.astype(dt), preferred_element_type=jnp.float32)
    o_ref[...] = out.astype(o_ref.dtype)


# --------------------------------------------------------------------------- helpers

def _poly_matrix(n_out, n_in, taps, factor):
    """M[o, i] = taps[K-1-a] with a = factor*(i+1) - o when 0 <= a < K, else 0.

    Encodes upfirdn along one axis (zero-upsample by `factor`, pad, correlate with the
    flipped taps) acting directly on the UNPADDED input samples i; the zero pad
    columns/rows contribute nothing and are therefore dropped.
    """
    K = len(taps)
    o = np.arange(n_out)[:, None]
    i = np.arange(n_in)[None, :]
    a = factor * (i + 1) - o
    valid = (a >= 0) & (a < K)
    t = np.asarray(taps, np.float32)
    return np.where(valid, t[np.clip(K - 1 - a, 0, K - 1)], 0.0).astype(np.float32)


def upsample_pallas(x, kernel=(1, 3, 3, 1), factor=2, tile_h=None):
    """Equivalent of Upsample.forward: upfirdn2d(x, make_kernel(kernel)*factor**2,
    up=factor, down=1, pad=(pad0, pad1)).  x: (N, C, H, W) -> (N, C, 2H, 2W)."""
    kernel = tuple(float(v) for v in kernel)
    if factor != 2 or len(kernel) != 4:
        # TODO(synk): general (kernel, factor) polyphase matrices; module default only.
        raise NotImplementedError("only factor=2 with a 4-tap separable kernel")

    N, C, H, W = x.shape
    NC = N * C
    dtype = x.dtype

    # Row-block size: largest multiple of 8 (<= tile_h, default 64) dividing H so the
    # common path needs no padding and no output slice.
    max_th = 64 if tile_h is None else max(8, (int(tile_h) // 8) * 8)
    TH = next((c for c in range(max_th, 7, -8) if H % c == 0), None)
    x3 = x.reshape(NC, H, W)
    if TH is None:
        # Ragged H: zero-pad the bottom to a multiple of 8 (correct: the pad rows only
        # feed output rows that are sliced off or receive a zero tap).
        # TODO(synk): masked ragged last block instead of pad + output slice.
        TH = 8
        Hp = -(-H // 8) * 8
        x3 = jnp.pad(x3, ((0, 0), (0, Hp - H), (0, 0)))
    else:
        Hp = H
    Hb = Hp // TH

    # Per-axis taps, including the factor**2 gain split across the two axes.
    t64 = np.asarray(kernel, np.float64)
    taps = (t64 / t64.sum()) * factor            # [1,3,3,1] -> [0.25, 0.75, 0.75, 0.25]

    mv = jnp.asarray(_poly_matrix(2 * TH, TH, taps, factor), dtype)       # (2TH, TH)
    mh = jnp.asarray(_poly_matrix(2 * W, W, taps, factor).T, dtype)       # (W, 2W)
    mvp_np = np.zeros((2 * TH, 8), np.float32)
    mvp_np[0, 7] = taps[-1]                       # row above -> output row 0
    mvn_np = np.zeros((2 * TH, 8), np.float32)
    mvn_np[2 * TH - 1, 0] = taps[0]               # row below -> output row 2*TH-1
    mvp = jnp.asarray(mvp_np, dtype)
    mvn = jnp.asarray(mvn_np, dtype)

    th8 = TH // 8
    last8 = Hp // 8 - 1

    out = pl.pallas_call(
        _upsample_block_kernel,
        out_shape=jax.ShapeDtypeStruct((NC, 2 * Hp, 2 * W), dtype),
        grid=(NC, Hb),
        in_specs=[
            # 8-row halo just above the block (clamped at the top border)
            pl.BlockSpec((None, 8, W),
                         lambda nc, hb: (nc, jnp.maximum(hb * th8 - 1, 0), 0)),
            # TH current rows of this (n, c) plane
            pl.BlockSpec((None, TH, W), lambda nc, hb: (nc, hb, 0)),
            # 8-row halo just below the block (clamped at the bottom border)
            pl.BlockSpec((None, 8, W),
                         lambda nc, hb: (nc, jnp.minimum((hb + 1) * th8, last8), 0)),
            # constant polyphase matrices (same block every step -> fetched once)
            pl.BlockSpec((2 * TH, TH), lambda nc, hb: (0, 0)),
            pl.BlockSpec((2 * TH, 8), lambda nc, hb: (0, 0)),
            pl.BlockSpec((2 * TH, 8), lambda nc, hb: (0, 0)),
            pl.BlockSpec((W, 2 * W), lambda nc, hb: (0, 0)),
        ],
        out_specs=pl.BlockSpec((None, 2 * TH, 2 * W), lambda nc, hb: (nc, hb, 0)),
        compiler_params=pltpu.CompilerParams(
            dimension_semantics=("parallel", "parallel")),
    )(x3, x3, x3, mv, mvp, mvn, mh)

    if Hp != H:
        out = out[:, :2 * H, :]
    return out.reshape(N, C, 2 * H, 2 * W)


# --------------------------------------------------------------------------- reference

def upsample_reference(x, kernel=(1, 3, 3, 1), factor=2):
    """Pure-JAX upfirdn2d reference (zero-upsample, pad, correlate flipped kernel)."""
    k1 = np.asarray(kernel, np.float64)
    k2 = np.outer(k1, k1)
    k2 = k2 / k2.sum() * (factor ** 2)
    K = k2.shape[0]
    p = K - factor
    pad0 = (p + 1) // 2 + factor - 1
    pad1 = p // 2
    N, C, H, W = x.shape
    Ho, Wo = H * factor, W * factor
    up = jnp.zeros((N, C, Ho, Wo), jnp.float32)
    up = up.at[:, :, ::factor, ::factor].set(x.astype(jnp.float32))
    up = jnp.pad(up, ((0, 0), (0, 0), (pad0, pad1), (pad0, pad1)))
    kf = k2[::-1, ::-1]
    out = jnp.zeros((N, C, Ho, Wo), jnp.float32)
    for a in range(K):
        for b in range(K):
            out = out + float(kf[a, b]) * up[:, :, a:a + Ho, b:b + Wo]
    return out


# --------------------------------------------------------------------------- main

if __name__ == "__main__":
    key = jax.random.PRNGKey(0)
    N, C, H, W = 2, 4, 16, 16

    x = jax.random.normal(key, (N, C, H, W), jnp.float32)
    # Round test values to bf16 so the check is insensitive to the MXU's internal
    # matmul precision mode (the filter taps 0.25 / 0.75 are bf16-exact as well).
    x = x.astype(jnp.bfloat16).astype(jnp.float32)

    ref = upsample_reference(x, kernel=(1, 3, 3, 1), factor=2)

    # bf16 path (native-dtype DMA, bf16 MXU operands, bf16 output); tile_h=8 gives two
    # row-blocks along H, exercising both halo paths.
    out_bf16 = jax.block_until_ready(
        upsample_pallas(x.astype(jnp.bfloat16), kernel=(1, 3, 3, 1), factor=2, tile_h=8))
    assert out_bf16.shape == (N, C, 2 * H, 2 * W), out_bf16.shape
    assert out_bf16.dtype == jnp.bfloat16, out_bf16.dtype
    assert bool(jnp.all(jnp.isfinite(out_bf16.astype(jnp.float32))))
    err_bf16 = float(jnp.max(jnp.abs(out_bf16.astype(jnp.float32) - ref)))
    assert err_bf16 < 5e-2, f"bf16 max abs err {err_bf16}"

    # f32 path with the default row-block (single block -> halo contributions masked).
    out_f32 = jax.block_until_ready(upsample_pallas(x, kernel=(1, 3, 3, 1), factor=2))
    assert out_f32.shape == (N, C, 2 * H, 2 * W), out_f32.shape
    assert out_f32.dtype == jnp.float32, out_f32.dtype
    assert bool(jnp.all(jnp.isfinite(out_f32)))
    err_f32 = float(jnp.max(jnp.abs(out_f32 - ref)))
    assert err_f32 < 2e-2, f"f32 max abs err {err_f32}"

    print("KERNEL_OK")
</pallas_src>

<mosaic_0001>
module attributes {stable_mosaic.version = 11 : i64} {
  func.func @_upsample_block_kernel(%arg0: i32, %arg1: i32, %arg2: memref<1x8x16xbf16, #tpu.memory_space<vmem>>, %arg3: memref<1x8x16xbf16, #tpu.memory_space<vmem>>, %arg4: memref<1x8x16xbf16, #tpu.memory_space<vmem>>, %arg5: memref<16x8xbf16, #tpu.memory_space<vmem>>, %arg6: memref<16x8xbf16, #tpu.memory_space<vmem>>, %arg7: memref<16x8xbf16, #tpu.memory_space<vmem>>, %arg8: memref<16x32xbf16, #tpu.memory_space<vmem>>, %arg9: memref<1x16x32xbf16, #tpu.memory_space<vmem>>) attributes {dimension_semantics = [#tpu.dimension_semantics<parallel>, #tpu.dimension_semantics<parallel>], iteration_bounds = array<i64: 8, 2>, scalar_prefetch = 0 : i64, scratch_operands = 0 : i64, tpu.core_type = #tpu.core_type<tc>, window_params = [{transform_indices = @transform_0, window_bounds = array<i64: 1, 8, 16>}, {transform_indices = @transform_1, window_bounds = array<i64: 1, 8, 16>}, {transform_indices = @transform_2, window_bounds = array<i64: 1, 8, 16>}, {pipeline_mode = #tpu.pipeline_mode<synchronous>, transform_indices = @transform_3, window_bounds = array<i64: 16, 8>}, {pipeline_mode = #tpu.pipeline_mode<synchronous>, transform_indices = @transform_4, window_bounds = array<i64: 16, 8>}, {pipeline_mode = #tpu.pipeline_mode<synchronous>, transform_indices = @transform_5, window_bounds = array<i64: 16, 8>}, {pipeline_mode = #tpu.pipeline_mode<synchronous>, transform_indices = @transform_6, window_bounds = array<i64: 16, 32>}, {transform_indices = @transform_7, window_bounds = array<i64: 1, 16, 32>}]} {
    %c0 = arith.constant 0 : index
    %c0_0 = arith.constant 0 : index
    %c0_1 = arith.constant 0 : index
    %0 = vector.load %arg3[%c0, %c0_0, %c0_1] : memref<1x8x16xbf16, #tpu.memory_space<vmem>>, vector<1x8x16xbf16>
    %1 = vector.shape_cast %0 : vector<1x8x16xbf16> to vector<8x16xbf16>
    %c0_2 = arith.constant 0 : index
    %c0_3 = arith.constant 0 : index
    %2 = vector.load %arg8[%c0_2, %c0_3] : memref<16x32xbf16, #tpu.memory_space<vmem>>, vector<16x32xbf16>
    %cst = arith.constant dense<0.000000e+00> : vector<8x32xf32>
    %3 = tpu.matmul %1, %2, %cst {dimension_numbers = #tpu.dot_dimension_numbers<[1], [0], [0], [1], [0, 0, 1, 1], [], []>} : vector<8x16xbf16>, vector<16x32xbf16>, vector<8x32xf32> -> vector<8x32xf32>
    %c0_4 = arith.constant 0 : index
    %c0_5 = arith.constant 0 : index
    %c0_6 = arith.constant 0 : index
    %4 = vector.load %arg2[%c0_4, %c0_5, %c0_6] : memref<1x8x16xbf16, #tpu.memory_space<vmem>>, vector<1x8x16xbf16>
    %5 = vector.shape_cast %4 : vector<1x8x16xbf16> to vector<8x16xbf16>
    %c0_7 = arith.constant 0 : index
    %c0_8 = arith.constant 0 : index
    %6 = vector.load %arg8[%c0_7, %c0_8] : memref<16x32xbf16, #tpu.memory_space<vmem>>, vector<16x32xbf16>
    %cst_9 = arith.constant dense<0.000000e+00> : vector<8x32xf32>
    %7 = tpu.matmul %5, %6, %cst_9 {dimension_numbers = #tpu.dot_dimension_numbers<[1], [0], [0], [1], [0, 0, 1, 1], [], []>} : vector<8x16xbf16>, vector<16x32xbf16>, vector<8x32xf32> -> vector<8x32xf32>
    %c0_10 = arith.constant 0 : index
    %c0_11 = arith.constant 0 : index
    %c0_12 = arith.constant 0 : index
    %8 = vector.load %arg4[%c0_10, %c0_11, %c0_12] : memref<1x8x16xbf16, #tpu.memory_space<vmem>>, vector<1x8x16xbf16>
    %9 = vector.shape_cast %8 : vector<1x8x16xbf16> to vector<8x16xbf16>
    %c0_13 = arith.constant 0 : index
    %c0_14 = arith.constant 0 : index
    %10 = vector.load %arg8[%c0_13, %c0_14] : memref<16x32xbf16, #tpu.memory_space<vmem>>, vector<16x32xbf16>
    %cst_15 = arith.constant dense<0.000000e+00> : vector<8x32xf32>
    %11 = tpu.matmul %9, %10, %cst_15 {dimension_numbers = #tpu.dot_dimension_numbers<[1], [0], [0], [1], [0, 0, 1, 1], [], []>} : vector<8x16xbf16>, vector<16x32xbf16>, vector<8x32xf32> -> vector<8x32xf32>
    %c0_i32 = arith.constant 0 : i32
    %12 = arith.cmpi sgt, %arg1, %c0_i32 : i32
    %cst_16 = arith.constant 1.000000e+00 : f32
    %cst_17 = arith.constant 0.000000e+00 : f32
    %13 = arith.select %12, %cst_16, %cst_17 : f32
    %c1_i32 = arith.constant 1 : i32
    %14 = arith.cmpi slt, %arg1, %c1_i32 : i32
    %cst_18 = arith.constant 1.000000e+00 : f32
    %cst_19 = arith.constant 0.000000e+00 : f32
    %15 = arith.select %14, %cst_18, %cst_19 : f32
    %c0_20 = arith.constant 0 : index
    %c0_21 = arith.constant 0 : index
    %16 = vector.load %arg5[%c0_20, %c0_21] : memref<16x8xbf16, #tpu.memory_space<vmem>>, vector<16x8xbf16>
    %17 = arith.truncf %3 : vector<8x32xf32> to vector<8x32xbf16>
    %cst_22 = arith.constant dense<0.000000e+00> : vector<16x32xf32>
    %18 = tpu.matmul %16, %17, %cst_22 {dimension_numbers = #tpu.dot_dimension_numbers<[1], [0], [0], [1], [0, 0, 1, 1], [], []>} : vector<16x8xbf16>, vector<8x32xbf16>, vector<16x32xf32> -> vector<16x32xf32>
    %c0_23 = arith.constant 0 : index
    %c0_24 = arith.constant 0 : index
    %19 = vector.load %arg6[%c0_23, %c0_24] : memref<16x8xbf16, #tpu.memory_space<vmem>>, vector<16x8xbf16>
    %20 = arith.truncf %7 : vector<8x32xf32> to vector<8x32xbf16>
    %cst_25 = arith.constant dense<0.000000e+00> : vector<16x32xf32>
    %21 = tpu.matmul %19, %20, %cst_25 {dimension_numbers = #tpu.dot_dimension_numbers<[1], [0], [0], [1], [0, 0, 1, 1], [], []>} : vector<16x8xbf16>, vector<8x32xbf16>, vector<16x32xf32> -> vector<16x32xf32>
    %22 = vector.broadcast %13 : f32 to vector<16x32xf32>
    %23 = arith.mulf %22, %21 : vector<16x32xf32>
    %24 = arith.addf %18, %23 : vector<16x32xf32>
    %c0_26 = arith.constant 0 : index
    %c0_27 = arith.constant 0 : index
    %25 = vector.load %arg7[%c0_26, %c0_27] : memref<16x8xbf16, #tpu.memory_space<vmem>>, vector<16x8xbf16>
    %26 = arith.truncf %11 : vector<8x32xf32> to vector<8x32xbf16>
    %cst_28 = arith.constant dense<0.000000e+00> : vector<16x32xf32>
    %27 = tpu.matmul %25, %26, %cst_28 {dimension_numbers = #tpu.dot_dimension_numbers<[1], [0], [0], [1], [0, 0, 1, 1], [], []>} : vector<16x8xbf16>, vector<8x32xbf16>, vector<16x32xf32> -> vector<16x32xf32>
    %28 = vector.broadcast %15 : f32 to vector<16x32xf32>
    %29 = arith.mulf %28, %27 : vector<16x32xf32>
    %30 = arith.addf %24, %29 : vector<16x32xf32>
    %31 = arith.truncf %30 : vector<16x32xf32> to vector<16x32xbf16>
    %c0_29 = arith.constant 0 : index
    %c0_30 = arith.constant 0 : index
    %c0_31 = arith.constant 0 : index
    %32 = vector.load %arg9[%c0_29, %c0_30, %c0_31] : memref<1x16x32xbf16, #tpu.memory_space<vmem>>, vector<1x16x32xbf16>
    %33 = vector.shape_cast %32 : vector<1x16x32xbf16> to vector<16x32xbf16>
    %34 = vector.shape_cast %31 : vector<16x32xbf16> to vector<1x16x32xbf16>
    tpu.vector_store %arg9[%c0_29, %c0_30, %c0_31], %34 {strides = array<i32>} : memref<1x16x32xbf16, #tpu.memory_space<vmem>>, vector<1x16x32xbf16>,
    return
  }
  func.func @transform_0(%arg0: i32, %arg1: i32) -> (i32, i32, i32) {
    %c1_i32 = arith.constant 1 : i32
    %0 = arith.muli %arg1, %c1_i32 : i32
    %c1_i32_0 = arith.constant 1 : i32
    %1 = arith.subi %0, %c1_i32_0 : i32
    %c0_i32 = arith.constant 0 : i32
    %2 = arith.maxsi %1, %c0_i32 : i32
    %c0_i32_1 = arith.constant 0 : i32
    %c0_i32_2 = arith.constant 0 : i32
    return %arg0, %2, %c0_i32_1 : i32, i32, i32
  }
  func.func @transform_1(%arg0: i32, %arg1: i32) -> (i32, i32, i32) {
    %c0_i32 = arith.constant 0 : i32
    %c0_i32_0 = arith.constant 0 : i32
    return %arg0, %arg1, %c0_i32 : i32, i32, i32
  }
  func.func @transform_2(%arg0: i32, %arg1: i32) -> (i32, i32, i32) {
    %c1_i32 = arith.constant 1 : i32
    %0 = arith.addi %arg1, %c1_i32 : i32
    %c1_i32_0 = arith.constant 1 : i32
    %1 = arith.muli %0, %c1_i32_0 : i32
    %c1_i32_1 = arith.constant 1 : i32
    %2 = arith.minsi %1, %c1_i32_1 : i32
    %c0_i32 = arith.constant 0 : i32
    %c0_i32_2 = arith.constant 0 : i32
    return %arg0, %2, %c0_i32 : i32, i32, i32
  }
  func.func @transform_3(%arg0: i32, %arg1: i32) -> (i32, i32) {
    %c0_i32 = arith.constant 0 : i32
    %c0_i32_0 = arith.constant 0 : i32
    %c0_i32_1 = arith.constant 0 : i32
    return %c0_i32, %c0_i32_0 : i32, i32
  }
  func.func @transform_4(%arg0: i32, %arg1: i32) -> (i32, i32) {
    %c0_i32 = arith.constant 0 : i32
    %c0_i32_0 = arith.constant 0 : i32
    %c0_i32_1 = arith.constant 0 : i32
    return %c0_i32, %c0_i32_0 : i32, i32
  }
  func.func @transform_5(%arg0: i32, %arg1: i32) -> (i32, i32) {
    %c0_i32 = arith.constant 0 : i32
    %c0_i32_0 = arith.constant 0 : i32
    %c0_i32_1 = arith.constant 0 : i32
    return %c0_i32, %c0_i32_0 : i32, i32
  }
  func.func @transform_6(%arg0: i32, %arg1: i32) -> (i32, i32) {
    %c0_i32 = arith.constant 0 : i32
    %c0_i32_0 = arith.constant 0 : i32
    %c0_i32_1 = arith.constant 0 : i32
    return %c0_i32, %c0_i32_0 : i32, i32
  }
  func.func @transform_7(%arg0: i32, %arg1: i32) -> (i32, i32, i32) {
    %c0_i32 = arith.constant 0 : i32
    %c0_i32_0 = arith.constant 0 : i32
    return %arg0, %arg1, %c0_i32 : i32, i32, i32
  }
}

</mosaic_0001>

<llo_original>
// kernel: tpu_custom_call.1
$region0: #{tpu_custom_call.1}
  #allocation0 [shape = 'u32[]', space=smem, size = 0x4, offset = 0x4, fixed_abs, tag = 'smem constant byte address 0x4 - core index']
  #allocation1 [shape = 'u32[144,128]{1,0:T(1,128)}', space=vmem, size = 0x12000, scoped, tag = 'internal scratch']
  %s0 = inlined_call_operand.hbm [shape: bf16[8,16,16], index: 0, kind: input, shape index: {}]
  %s1 = inlined_call_operand.hbm [shape: bf16[8,16,16], index: 1, kind: input, shape index: {}]
  %s2 = inlined_call_operand.hbm [shape: bf16[8,16,16], index: 2, kind: input, shape index: {}]
  %s3 = inlined_call_operand.vmem [shape: bf16[16,8], index: 3, kind: input, shape index: {}]
  %s4 = inlined_call_operand.vmem [shape: bf16[16,8], index: 4, kind: input, shape index: {}]
  %s5 = inlined_call_operand.vmem [shape: bf16[16,8], index: 5, kind: input, shape index: {}]
  %s6 = inlined_call_operand.vmem [shape: bf16[16,32], index: 6, kind: input, shape index: {}]
  %s7 = inlined_call_operand.hbm [shape: bf16[8,32,32], index: 7, kind: output, shape index: {}]
  %s8 = sld [smem:[#allocation0]]
  $region73: #{tpu_custom_call.1} parent=0
    _
  %s10 = ssub.s32 1, %s8
  %s11 = scalar_select 0, %s10, %s8
  $region1: #{tpu_custom_call.1} parent=0
    #allocation2 [shape = 'u8[4096]{0}', space=vmem, size = 0x1000, scoped, tag = 'input window, operand 0']
    #allocation3 [shape = 's32[2]{0}', space=sflag, size = 0x8, scoped, tag = 'scoped memory for tpu_custom_call.1']
    #allocation4 [shape = 's32[2]{0}', space=sflag, size = 0x8, scoped, tag = 'scoped memory for tpu_custom_call.1']
    #allocation5 [shape = 'u8[4096]{0}', space=vmem, size = 0x1000, scoped, tag = 'input window, operand 1']
    #allocation6 [shape = 's32[2]{0}', space=sflag, size = 0x8, scoped, tag = 'scoped memory for tpu_custom_call.1']
    #allocation7 [shape = 'u8[4096]{0}', space=vmem, size = 0x1000, scoped, tag = 'input window, operand 2']
    #allocation8 [shape = 'u8[8192]{0}', space=vmem, size = 0x2000, scoped, tag = 'output window, operand 0']
    %12 = vsyncpa [#allocation3], 0
    %s13 = scalar_lea.sflag [#allocation3], 1
    %14 = vsyncpa %s13, 0
    %15 = vsyncpa [#allocation6], 0
    %s16 = scalar_lea.sflag [#allocation6], 1
    %17 = vsyncpa %s16, 0
    %18 = vsyncpa [#allocation4], 0
    %s19 = scalar_lea.sflag [#allocation4], 1
    %20 = vsyncpa %s19, 0
    loop: start=0, step=1, limit=18
    $region2: #{tpu_custom_call.1} parent=1 // loop_pre_header
      _
    $region3: #{tpu_custom_call.1} parent=1 // loop_header
      %s22 = sphi 0, %s26
      %p23 = scmp.ge.s32.totalorder %s22, 18
      %s29 = sphi 0, %s41
      %s30 = sphi 0, %s37
      %s31 = sphi 0, %s29
      %s32 = sphi 0, %s30
      %s33 = sphi 0, %s31
      %s34 = sphi 0, %s32
      %s52 = sphi 0, %s54
      %s55 = sphi 0, %s52
      %s56 = sphi 0, %s55
      %s72 = sphi 0, %s56
      %s80 = sphi 0, %s82
      %s83 = sphi 0, %s80
      %s84 = sphi 0, %s83
      %s100 = sphi 0, %s84
      %s114 = sphi 0, %s116
      %s117 = sphi 0, %s114
      %s118 = sphi 0, %s117
      %s134 = sphi 0, %s118
      %s138 = sphi 0, %s138
      %s140 = sphi 0, %s138
      %s141 = sphi 0, %s140
      %s155 = sphi 0, %s141
      %s159 = sphi 0, %s159
      %s161 = sphi 0, %s159
      %s162 = sphi 0, %s161
      %s176 = sphi 0, %s162
      %s180 = sphi 0, %s180
      %s182 = sphi 0, %s180
      %s183 = sphi 0, %s182
      %s197 = sphi 0, %s183
      %s201 = sphi 0, %s201
      %s203 = sphi 0, %s201
      %s204 = sphi 0, %s203
      %s218 = sphi 0, %s204
      %s226 = sphi 0, %s228
      %s229 = sphi 0, %s226
      %s230 = sphi 0, %s229
      %s246 = sphi 0, %s230
    $region4: #{tpu_custom_call.1} parent=1 // loop_header_branch
      %25 = sbr.rel (%p23) target = $region8
    $region5: #{tpu_custom_call.1} parent=1 // loop_body
      %s27 = ssub.s32 %s22, 1
      %s28 = ssub.s32 %s22, 2
      %s35 = sadd.s32 1, %s30
      %p36 = scmp.ge.s32.totalorder %s35, 2
      %s37 = scalar_select %p36, 0, %s35
      %s38 = sadd.s32 1, %s29
      %s39 = scalar_select %p36, %s38, %s29
      %p40 = scmp.ge.s32.totalorder %s39, 8
      %s41 = scalar_select %p40, 0, %s39
      %s42 = ssub.s32 %s30, 1
      %p43 = scmp.gt.s32.totalorder %s42, 0
      %s44 = scalar_select %p43, %s42, 0
      %s45 = ssub.s32 %s37, 1
      %p46 = scmp.gt.s32.totalorder %s45, 0
      %s47 = scalar_select %p46, %s45, 0
      %s48 = ssub.s32 %s29, %s41
      %s49 = ssub.s32 %s44, %s47
      %s50 = sor.u32 %s48, %s49
      %p51 = scmp.eq.s32.totalorder %s50, 0
      %s53 = sadd.s32 %s52, 1
      %s54 = scalar_select %p51, %s52, %s53
      %p57 = pneg %p51
      %p58 = scmp.eq.s32.totalorder %s22, 15
      %p59 = por %p57, %p58
      %p60 = scmp.ne.s32.totalorder %s52, %s55
      %p61 = scmp.eq.s32.totalorder %s22, 0
      %p62 = por %p60, %p61
      %p63 = scmp.ne.s32.totalorder %s52, %s55
      %p64 = scmp.eq.s32.totalorder %s27, 15
      %p65 = por %p63, %p64
      %p66 = scmp.ne.s32.totalorder %s55, %s56
      %p67 = scmp.eq.s32.totalorder %s27, 0
      %p68 = por %p66, %p67
      %p69 = scmp.ne.s32.totalorder %s55, %s56
      %p70 = scmp.eq.s32.totalorder %s28, 15
      %p71 = por %p69, %p70
      %p73 = scmp.ne.s32.totalorder %s56, %s72
      %p74 = scmp.eq.s32.totalorder %s28, 0
      %p75 = por %p73, %p74
      %s76 = ssub.s32 %s29, %s41
      %s77 = ssub.s32 %s30, %s37
      %s78 = sor.u32 %s76, %s77
      %p79 = scmp.eq.s32.totalorder %s78, 0
      %s81 = sadd.s32 %s80, 1
      %s82 = scalar_select %p79, %s80, %s81
      %p85 = pneg %p79
      %p86 = scmp.eq.s32.totalorder %s22, 15
      %p87 = por %p85, %p86
      %p88 = scmp.ne.s32.totalorder %s80, %s83
      %p89 = scmp.eq.s32.totalorder %s22, 0
      %p90 = por %p88, %p89
      %p91 = scmp.ne.s32.totalorder %s80, %s83
      %p92 = scmp.eq.s32.totalorder %s27, 15
      %p93 = por %p91, %p92
      %p94 = scmp.ne.s32.totalorder %s83, %s84
      %p95 = scmp.eq.s32.totalorder %s27, 0
      %p96 = por %p94, %p95
      %p97 = scmp.ne.s32.totalorder %s83, %s84
      %p98 = scmp.eq.s32.totalorder %s28, 15
      %p99 = por %p97, %p98
      %p101 = scmp.ne.s32.totalorder %s84, %s100
      %p102 = scmp.eq.s32.totalorder %s28, 0
      %p103 = por %p101, %p102
      %s104 = sadd.s32 %s30, 1
      %p105 = scmp.lt.s32.totalorder %s104, 1
      %s106 = scalar_select %p105, %s104, 1
      %s107 = sadd.s32 %s37, 1
      %p108 = scmp.lt.s32.totalorder %s107, 1
      %s109 = scalar_select %p108, %s107, 1
      %s110 = ssub.s32 %s29, %s41
      %s111 = ssub.s32 %s106, %s109
      %s112 = sor.u32 %s110, %s111
      %p113 = scmp.eq.s32.totalorder %s112, 0
      %s115 = sadd.s32 %s114, 1
      %s116 = scalar_select %p113, %s114, %s115
      %p119 = pneg %p113
      %p120 = scmp.eq.s32.totalorder %s22, 15
      %p121 = por %p119, %p120
      %p122 = scmp.ne.s32.totalorder %s114, %s117
      %p123 = scmp.eq.s32.totalorder %s22, 0
      %p124 = por %p122, %p123
      %p125 = scmp.ne.s32.totalorder %s114, %s117
      %p126 = scmp.eq.s32.totalorder %s27, 15
      %p127 = por %p125, %p126
      %p128 = scmp.ne.s32.totalorder %s117, %s118
      %p129 = scmp.eq.s32.totalorder %s27, 0
      %p130 = por %p128, %p129
      %p131 = scmp.ne.s32.totalorder %s117, %s118
      %p132 = scmp.eq.s32.totalorder %s28, 15
      %p133 = por %p131, %p132
      %p135 = scmp.ne.s32.totalorder %s118, %s134
      %p136 = scmp.eq.s32.totalorder %s28, 0
      %p137 = por %p135, %p136
      %s139 = sadd.s32 %s138, 1
      %p142 = scmp.eq.s32.totalorder %s22, 15
      %p143 = scmp.ne.s32.totalorder %s138, %s140
      %p144 = scmp.eq.s32.totalorder %s22, 0
      %p145 = por %p143, %p144
      %p146 = scmp.ne.s32.totalorder %s138, %s140
      %p147 = scmp.eq.s32.totalorder %s27, 15
      %p148 = por %p146, %p147
      %p149 = scmp.ne.s32.totalorder %s140, %s141
      %p150 = scmp.eq.s32.totalorder %s27, 0
      %p151 = por %p149, %p150
      %p152 = scmp.ne.s32.totalorder %s140, %s141
      %p153 = scmp.eq.s32.totalorder %s28, 15
      %p154 = por %p152, %p153
      %p156 = scmp.ne.s32.totalorder %s141, %s155
      %p157 = scmp.eq.s32.totalorder %s28, 0
      %p158 = por %p156, %p157
      %s160 = sadd.s32 %s159, 1
      %p163 = scmp.eq.s32.totalorder %s22, 15
      %p164 = scmp.ne.s32.totalorder %s159, %s161
      %p165 = scmp.eq.s32.totalorder %s22, 0
      %p166 = por %p164, %p165
      %p167 = scmp.ne.s32.totalorder %s159, %s161
      %p168 = scmp.eq.s32.totalorder %s27, 15
      %p169 = por %p167, %p168
      %p170 = scmp.ne.s32.totalorder %s161, %s162
      %p171 = scmp.eq.s32.totalorder %s27, 0
      %p172 = por %p170, %p171
      %p173 = scmp.ne.s32.totalorder %s161, %s162
      %p174 = scmp.eq.s32.totalorder %s28, 15
      %p175 = por %p173, %p174
      %p177 = scmp.ne.s32.totalorder %s162, %s176
      %p178 = scmp.eq.s32.totalorder %s28, 0
      %p179 = por %p177, %p178
      %s181 = sadd.s32 %s180, 1
      %p184 = scmp.eq.s32.totalorder %s22, 15
      %p185 = scmp.ne.s32.totalorder %s180, %s182
      %p186 = scmp.eq.s32.totalorder %s22, 0
      %p187 = por %p185, %p186
      %p188 = scmp.ne.s32.totalorder %s180, %s182
      %p189 = scmp.eq.s32.totalorder %s27, 15
      %p190 = por %p188, %p189
      %p191 = scmp.ne.s32.totalorder %s182, %s183
      %p192 = scmp.eq.s32.totalorder %s27, 0
      %p193 = por %p191, %p192
      %p194 = scmp.ne.s32.totalorder %s182, %s183
      %p195 = scmp.eq.s32.totalorder %s28, 15
      %p196 = por %p194, %p195
      %p198 = scmp.ne.s32.totalorder %s183, %s197
      %p199 = scmp.eq.s32.totalorder %s28, 0
      %p200 = por %p198, %p199
      %s202 = sadd.s32 %s201, 1
      %p205 = scmp.eq.s32.totalorder %s22, 15
      %p206 = scmp.ne.s32.totalorder %s201, %s203
      %p207 = scmp.eq.s32.totalorder %s22, 0
      %p208 = por %p206, %p207
      %p209 = scmp.ne.s32.totalorder %s201, %s203
      %p210 = scmp.eq.s32.totalorder %s27, 15
      %p211 = por %p209, %p210
      %p212 = scmp.ne.s32.totalorder %s203, %s204
      %p213 = scmp.eq.s32.totalorder %s27, 0
      %p214 = por %p212, %p213
      %p215 = scmp.ne.s32.totalorder %s203, %s204
      %p216 = scmp.eq.s32.totalorder %s28, 15
      %p217 = por %p215, %p216
      %p219 = scmp.ne.s32.totalorder %s204, %s218
      %p220 = scmp.eq.s32.totalorder %s28, 0
      %p221 = por %p219, %p220
      %s222 = ssub.s32 %s29, %s41
      %s223 = ssub.s32 %s30, %s37
      %s224 = sor.u32 %s222, %s223
      %p225 = scmp.eq.s32.totalorder %s224, 0
      %s227 = sadd.s32 %s226, 1
      %s228 = scalar_select %p225, %s226, %s227
      %p231 = pneg %p225
      %p232 = scmp.eq.s32.totalorder %s22, 15
      %p233 = por %p231, %p232
      %p234 = scmp.ne.s32.totalorder %s226, %s229
      %p235 = scmp.eq.s32.totalorder %s22, 0
      %p236 = por %p234, %p235
      %p237 = scmp.ne.s32.totalorder %s226, %s229
      %p238 = scmp.eq.s32.totalorder %s27, 15
      %p239 = por %p237, %p238
      %p240 = scmp.ne.s32.totalorder %s229, %s230
      %p241 = scmp.eq.s32.totalorder %s27, 0
      %p242 = por %p240, %p241
      %p243 = scmp.ne.s32.totalorder %s229, %s230
      %p244 = scmp.eq.s32.totalorder %s28, 15
      %p245 = por %p243, %p244
      %p247 = scmp.ne.s32.totalorder %s230, %s246
      %p248 = scmp.eq.s32.totalorder %s28, 0
      %p249 = por %p247, %p248
      %p250 = scmp.le.s32.totalorder 1, %s22
      %p251 = scmp.lt.s32.totalorder %s22, 17
      %p252 = pnand %p250, %p251
      %p253 = pneg %p252
      // Predicated region
      $region9: #{tpu_custom_call.1} parent=5 // pred_check
        _
      $region10: #{tpu_custom_call.1} parent=5 // pred_check_branch
        %255 = sbr.rel (%p252) target = $region12
      $region11: #{tpu_custom_call.1} parent=5 // pred_region
        %s256 = ssub.s32 %s22, 1
        // Predicated region
        $region13: #{tpu_custom_call.1} parent=11 // pred_check
          %p257 = pneg %p151
        $region14: #{tpu_custom_call.1} parent=11 // pred_check_branch
          %259 = sbr.rel (%p257) target = $region16
        $region15: #{tpu_custom_call.1} parent=11 // pred_region
          _
        $region16: #{tpu_custom_call.1} parent=11 // pred_fallthru
          _
        // Predicated region
        $region17: #{tpu_custom_call.1} parent=11 // pred_check
          %p260 = pneg %p172
        $region18: #{tpu_custom_call.1} parent=11 // pred_check_branch
          %262 = sbr.rel (%p260) target = $region20
        $region19: #{tpu_custom_call.1} parent=11 // pred_region
          _
        $region20: #{tpu_custom_call.1} parent=11 // pred_fallthru
          _
        // Predicated region
        $region21: #{tpu_custom_call.1} parent=11 // pred_check
          %p263 = pneg %p193
        $region22: #{tpu_custom_call.1} parent=11 // pred_check_branch
          %265 = sbr.rel (%p263) target = $region24
        $region23: #{tpu_custom_call.1} parent=11 // pred_region
          _
        $region24: #{tpu_custom_call.1} parent=11 // pred_fallthru
          _
        // Predicated region
        $region25: #{tpu_custom_call.1} parent=11 // pred_check
          %p266 = pneg %p214
        $region26: #{tpu_custom_call.1} parent=11 // pred_check_branch
          %268 = sbr.rel (%p266) target = $region28
        $region27: #{tpu_custom_call.1} parent=11 // pred_region
          _
        $region28: #{tpu_custom_call.1} parent=11 // pred_fallthru
          _
      $region12: #{tpu_custom_call.1} parent=5 // pred_fallthru
        _
      %p269 = scmp.lt.s32.totalorder %s22, 16
      // Predicated region
      $region29: #{tpu_custom_call.1} parent=5 // pred_check
        %p270 = pneg %p269
      $region30: #{tpu_custom_call.1} parent=5 // pred_check_branch
        %272 = sbr.rel (%p270) target = $region32
      $region31: #{tpu_custom_call.1} parent=5 // pred_region
        // Predicated region
        $region33: #{tpu_custom_call.1} parent=31 // pred_check
          %p273 = pneg %p62
        $region34: #{tpu_custom_call.1} parent=31 // pred_check_branch
          %275 = sbr.rel (%p273) target = $region36
        $region35: #{tpu_custom_call.1} parent=31 // pred_region
          %s276 = sand.u32 %s52, 1
          %s277 = scalar_lea.sflag [#allocation3], %s276
          %s278 = sand.u32 %s52, 1
          %s279 = smul.addr %s278, 4
          %s280 = scalar_lea.vmem [#allocation2], %s279
          %s281 = ssub.s32 %s30, 1
          %p282 = scmp.gt.s32.totalorder %s281, 0
          %s283 = scalar_select %p282, %s281, 0
          %s285 = ssub.s32 64, 64
          %286 = vsyncadd %s277, %s285
          %s287 = smul.addr %s29, 2
          %s288 = sadd.s32 %s283, %s287
          %s289 = smul.addr %s288, 64
          %s290 = scalar_lea.hbm %s0, %s289
          %s292 = sshll.u32 %s280, 4
          %s293 = int_to_ptr.vmem [resolvable:$true] %s292
          %295 = dma.hbm_to_vmem [thread:$0]  %s290, 64, %s293, %s277
        $region36: #{tpu_custom_call.1} parent=31 // pred_fallthru
          _
        // Predicated region
        $region37: #{tpu_custom_call.1} parent=31 // pred_check
          %p296 = pneg %p90
        $region38: #{tpu_custom_call.1} parent=31 // pred_check_branch
          %298 = sbr.rel (%p296) target = $region40
        $region39: #{tpu_custom_call.1} parent=31 // pred_region
          %s299 = sand.u32 %s22, 1
          %s300 = scalar_lea.sflag [#allocation6], %s299
          %s301 = sand.u32 %s80, 1
          %s302 = smul.addr %s301, 4
          %s303 = scalar_lea.vmem [#allocation5], %s302
          %s305 = ssub.s32 64, 64
          %306 = vsyncadd %s300, %s305
          %s307 = smul.addr %s29, 2
          %s308 = sadd.s32 %s30, %s307
          %s309 = smul.addr %s308, 64
          %s310 = scalar_lea.hbm %s1, %s309
          %s312 = sshll.u32 %s303, 4
          %s313 = int_to_ptr.vmem [resolvable:$true] %s312
          %315 = dma.hbm_to_vmem [thread:$0]  %s310, 64, %s313, %s300
        $region40: #{tpu_custom_call.1} parent=31 // pred_fallthru
          _
        // Predicated region
        $region41: #{tpu_custom_call.1} parent=31 // pred_check
          %p316 = pneg %p124
        $region42: #{tpu_custom_call.1} parent=31 // pred_check_branch
          %318 = sbr.rel (%p316) target = $region44
        $region43: #{tpu_custom_call.1} parent=31 // pred_region
          %s319 = sand.u32 %s22, 1
          %s320 = scalar_lea.sflag [#allocation6], %s319
          %s321 = sand.u32 %s114, 1
          %s322 = smul.addr %s321, 4
          %s323 = scalar_lea.vmem [#allocation7], %s322
          %s324 = sadd.s32 %s30, 1
          %p325 = scmp.lt.s32.totalorder %s324, 1
          %s326 = scalar_select %p325, %s324, 1
          %s328 = ssub.s32 64, 64
          %329 = vsyncadd %s320, %s328
          %s330 = smul.addr %s29, 2
          %s331 = sadd.s32 %s326, %s330
          %s332 = smul.addr %s331, 64
          %s333 = scalar_lea.hbm %s2, %s332
          %s335 = sshll.u32 %s323, 4
          %s336 = int_to_ptr.vmem [resolvable:$true] %s335
          %338 = dma.hbm_to_vmem [thread:$0]  %s333, 64, %s336, %s320
        $region44: #{tpu_custom_call.1} parent=31 // pred_fallthru
          _
      $region32: #{tpu_custom_call.1} parent=5 // pred_fallthru
        _
      %p339 = scmp.le.s32.totalorder 1, %s22
      %p340 = scmp.lt.s32.totalorder %s22, 17
      %p341 = pnand %p339, %p340
      %p342 = pneg %p341
      // Predicated region
      $region45: #{tpu_custom_call.1} parent=5 // pred_check
        _
      $region46: #{tpu_custom_call.1} parent=5 // pred_check_branch
        %344 = sbr.rel (%p341) target = $region48
      $region47: #{tpu_custom_call.1} parent=5 // pred_region
        %s345 = ssub.s32 %s22, 1
        %s346 = sand.u32 %s55, 1
        %s347 = scalar_lea.sflag [#allocation3], %s346
        %s348 = sand.u32 %s55, 1
        %s349 = smul.addr %s348, 4
        %s350 = scalar_lea.vmem [#allocation2], %s349
        // Predicated region
        $region49: #{tpu_custom_call.1} parent=47 // pred_check
          %p351 = pneg %p68
        $region50: #{tpu_custom_call.1} parent=47 // pred_check_branch
          %353 = sbr.rel (%p351) target = $region52
        $region51: #{tpu_custom_call.1} parent=47 // pred_region
          %354 = dma.done %s347, 64
        $region52: #{tpu_custom_call.1} parent=47 // pred_fallthru
          _
        %s355 = sand.u32 %s27, 1
        %s356 = scalar_lea.sflag [#allocation6], %s355
        %s357 = sand.u32 %s83, 1
        %s358 = smul.addr %s357, 4
        %s359 = scalar_lea.vmem [#allocation5], %s358
        // Predicated region
        $region53: #{tpu_custom_call.1} parent=47 // pred_check
          %p360 = pneg %p96
        $region54: #{tpu_custom_call.1} parent=47 // pred_check_branch
          %362 = sbr.rel (%p360) target = $region56
        $region55: #{tpu_custom_call.1} parent=47 // pred_region
          %363 = dma.done %s356, 64
        $region56: #{tpu_custom_call.1} parent=47 // pred_fallthru
          _
        %s364 = sand.u32 %s27, 1
        %s365 = scalar_lea.sflag [#allocation6], %s364
        %s366 = sand.u32 %s117, 1
        %s367 = smul.addr %s366, 4
        %s368 = scalar_lea.vmem [#allocation7], %s367
        // Predicated region
        $region57: #{tpu_custom_call.1} parent=47 // pred_check
          %p369 = pneg %p130
        $region58: #{tpu_custom_call.1} parent=47 // pred_check_branch
          %371 = sbr.rel (%p369) target = $region60
        $region59: #{tpu_custom_call.1} parent=47 // pred_region
          %372 = dma.done %s365, 64
        $region60: #{tpu_custom_call.1} parent=47 // pred_fallthru
          _
        %s373 = sand.u32 %s55, 1
        %s374 = scalar_lea.sflag [#allocation3], %s373
        %s375 = sand.u32 %s55, 1
        %s376 = smul.addr %s375, 4
        %s377 = scalar_lea.vmem [#allocation2], %s376
        %p378 = pneg %p68
        %p379 = pneg %p65
        %s380 = sand.u32 %s27, 1
        %s381 = scalar_lea.sflag [#allocation6], %s380
        %s382 = sand.u32 %s83, 1
        %s383 = smul.addr %s382, 4
        %s384 = scalar_lea.vmem [#allocation5], %s383
        %p385 = pneg %p96
        %p386 = pneg %p93
        %s387 = sand.u32 %s27, 1
        %s388 = scalar_lea.sflag [#allocation6], %s387
        %s389 = sand.u32 %s117, 1
        %s390 = smul.addr %s389, 4
        %s391 = scalar_lea.vmem [#allocation7], %s390
        %p392 = pneg %p130
        %p393 = pneg %p127
        %p394 = pneg %p151
        %p395 = pneg %p148
        %p396 = pneg %p172
        %p397 = pneg %p169
        %p398 = pneg %p193
        %p399 = pneg %p190
        %p400 = pneg %p214
        %p401 = pneg %p211
        %p402 = pneg %p242
        %p403 = pneg %p239
        %s404 = sand.u32 %s229, 1
        %s405 = scalar_lea.sflag [#allocation4], %s404
        %s406 = sand.u32 %s229, 1
        %s407 = smul.addr %s406, 8
        %s408 = scalar_lea.vmem [#allocation8], %s407
        %s409 = ssub.s32 %s32, 1
        %p410 = scmp.gt.s32.totalorder %s409, 0
        %s411 = scalar_select %p410, %s409, 0
        %s412 = sadd.s32 %s32, 1
        %p413 = scmp.lt.s32.totalorder %s412, 1
        %s414 = scalar_select %p413, %s412, 1
        %s415 = smul.u32 2, %s32
        %v417 = vld [vmem:[%s359] sm:$0xf]
        %v418 = vld [vmem:[%s6] sm:$0xf]
        %v419 = vld [vmem:[%s6 + $0x4] sm:$0xf]
        %v422 = vunpack.c.l.b16 %v418
        %v423 = vunpack.c.l.b16 %v419
        %v424 = vpack.c.b16 %v423, %v422
        %vm426 = vcmask 130048
        %v428 = vsel %vm426, %v417, 0
        %430 = vmatprep.subr.bf16.mxu0 0
        %431 = vmatpush1.bf16.msra.mxu0 %v424
        %432 = vmatprep.subr.bf16.mxu0 0
        %433 = vmatpush1.bf16.msra.mxu0 0
        %434 = vmatprep.subr.bf16.mxu0 0
        %435 = vmatpush1.bf16.msra.mxu0 0
        %436 = vmatprep.subr.bf16.mxu0 0
        %437 = vmatpush1.bf16.msra.mxu0 0
        %438 = vmatprep.subr.bf16.mxu0 0
        %439 = vmatpush1.bf16.msra.mxu0 0
        %440 = vmatprep.subr.bf16.mxu0 0
        %441 = vmatpush1.bf16.msra.mxu0 0
        %442 = vmatprep.subr.bf16.mxu0 0
        %443 = vmatpush1.bf16.msra.mxu0 0
        %444 = vmatprep.subr.bf16.mxu0 0
        %445 = vmatpush1.bf16.msra.mxu0 0
        %446 = vmatprep.subr.bf16.mxu0 0
        %447 = vmatpush1.bf16.msra.mxu0 0
        %448 = vmatprep.subr.bf16.mxu0 0
        %449 = vmatpush1.bf16.msra.mxu0 0
        %450 = vmatprep.subr.bf16.mxu0 0
        %451 = vmatpush1.bf16.msra.mxu0 0
        %452 = vmatprep.subr.bf16.mxu0 0
        %453 = vmatpush1.bf16.msra.mxu0 0
        %454 = vmatprep.subr.bf16.mxu0 0
        %455 = vmatpush1.bf16.msra.mxu0 0
        %456 = vmatprep.subr.bf16.mxu0 0
        %457 = vmatpush1.bf16.msra.mxu0 0
        %458 = vmatprep.subr.bf16.mxu0 0
        %459 = vmatpush1.bf16.msra.mxu0 0
        %460 = vmatprep.subr.bf16.mxu0 0
        %461 = vmatpush1.bf16.msra.mxu0 0
        %462 = vmatprep.mubr.bf16.mxu0 0
        %463 = vmatmul.mubr.bf16.gmra.mrb[0].mxu0 %v428
        %v464 = vpop.f32.mrb[0].mxu0
        %v465 = vadd.f32 0.0, %v464
        %v466 = vpop.f32.mrb[0].mxu0
        %v467 = vpop.f32.mrb[0].mxu0
        %v468 = vpop.f32.mrb[0].mxu0
        %469 = vdwg.mxu0
        %v470 = vld [vmem:[%s350] sm:$0xf]
        %v472 = vsel %vm426, %v470, 0
        %474 = vmatprep.subr.bf16.mxu0 0
        %475 = vmatpush1.bf16.msra.mxu0 %v424
        %476 = vmatprep.subr.bf16.mxu0 0
        %477 = vmatpush1.bf16.msra.mxu0 0
        %478 = vmatprep.subr.bf16.mxu0 0
        %479 = vmatpush1.bf16.msra.mxu0 0
        %480 = vmatprep.subr.bf16.mxu0 0
        %481 = vmatpush1.bf16.msra.mxu0 0
        %482 = vmatprep.subr.bf16.mxu0 0
        %483 = vmatpush1.bf16.msra.mxu0 0
        %484 = vmatprep.subr.bf16.mxu0 0
        %485 = vmatpush1.bf16.msra.mxu0 0
        %486 = vmatprep.subr.bf16.mxu0 0
        %487 = vmatpush1.bf16.msra.mxu0 0
        %488 = vmatprep.subr.bf16.mxu0 0
        %489 = vmatpush1.bf16.msra.mxu0 0
        %490 = vmatprep.subr.bf16.mxu0 0
        %491 = vmatpush1.bf16.msra.mxu0 0
        %492 = vmatprep.subr.bf16.mxu0 0
        %493 = vmatpush1.bf16.msra.mxu0 0
        %494 = vmatprep.subr.bf16.mxu0 0
        %495 = vmatpush1.bf16.msra.mxu0 0
        %496 = vmatprep.subr.bf16.mxu0 0
        %497 = vmatpush1.bf16.msra.mxu0 0
        %498 = vmatprep.subr.bf16.mxu0 0
        %499 = vmatpush1.bf16.msra.mxu0 0
        %500 = vmatprep.subr.bf16.mxu0 0
        %501 = vmatpush1.bf16.msra.mxu0 0
        %502 = vmatprep.subr.bf16.mxu0 0
        %503 = vmatpush1.bf16.msra.mxu0 0
        %504 = vmatprep.subr.bf16.mxu0 0
        %505 = vmatpush1.bf16.msra.mxu0 0
        %506 = vmatprep.mubr.bf16.mxu0 0
        %507 = vmatmul.mubr.bf16.gmra.mrb[0].mxu0 %v472
        %v508 = vpop.f32.mrb[0].mxu0
        %v509 = vadd.f32 0.0, %v508
        %v510 = vpop.f32.mrb[0].mxu0
        %v511 = vpop.f32.mrb[0].mxu0
        %v512 = vpop.f32.mrb[0].mxu0
        %513 = vdwg.mxu0
        %v514 = vld [vmem:[%s368] sm:$0xf]
        %v516 = vsel %vm426, %v514, 0
        %518 = vmatprep.subr.bf16.mxu0 0
        %519 = vmatpush1.bf16.msra.mxu0 %v424
        %520 = vmatprep.subr.bf16.mxu0 0
        %521 = vmatpush1.bf16.msra.mxu0 0
        %522 = vmatprep.subr.bf16.mxu0 0
        %523 = vmatpush1.bf16.msra.mxu0 0
        %524 = vmatprep.subr.bf16.mxu0 0
        %525 = vmatpush1.bf16.msra.mxu0 0
        %526 = vmatprep.subr.bf16.mxu0 0
        %527 = vmatpush1.bf16.msra.mxu0 0
        %528 = vmatprep.subr.bf16.mxu0 0
        %529 = vmatpush1.bf16.msra.mxu0 0
        %530 = vmatprep.subr.bf16.mxu0 0
        %531 = vmatpush1.bf16.msra.mxu0 0
        %532 = vmatprep.subr.bf16.mxu0 0
        %533 = vmatpush1.bf16.msra.mxu0 0
        %534 = vmatprep.subr.bf16.mxu0 0
        %535 = vmatpush1.bf16.msra.mxu0 0
        %536 = vmatprep.subr.bf16.mxu0 0
        %537 = vmatpush1.bf16.msra.mxu0 0
        %538 = vmatprep.subr.bf16.mxu0 0
        %539 = vmatpush1.bf16.msra.mxu0 0
        %540 = vmatprep.subr.bf16.mxu0 0
        %541 = vmatpush1.bf16.msra.mxu0 0
        %542 = vmatprep.subr.bf16.mxu0 0
        %543 = vmatpush1.bf16.msra.mxu0 0
        %544 = vmatprep.subr.bf16.mxu0 0
        %545 = vmatpush1.bf16.msra.mxu0 0
        %546 = vmatprep.subr.bf16.mxu0 0
        %547 = vmatpush1.bf16.msra.mxu0 0
        %548 = vmatprep.subr.bf16.mxu0 0
        %549 = vmatpush1.bf16.msra.mxu0 0
        %550 = vmatprep.mubr.bf16.mxu0 0
        %551 = vmatmul.mubr.bf16.gmra.mrb[0].mxu0 %v516
        %v552 = vpop.f32.mrb[0].mxu0
        %v553 = vadd.f32 0.0, %v552
        %v554 = vpop.f32.mrb[0].mxu0
        %v555 = vpop.f32.mrb[0].mxu0
        %v556 = vpop.f32.mrb[0].mxu0
        %557 = vdwg.mxu0
        %p558 = scmp.gt.s32.totalorder %s32, 0
        %s559 = scalar_select %p558, 1.0, 0.0
        %p560 = scmp.lt.s32.totalorder %s32, 1
        %s561 = scalar_select %p560, 1.0, 0.0
        %v562 = vld [vmem:[%s3] sm:$0xf]
        %v563 = vld [vmem:[%s3 + $0x4] sm:$0xf]
        %v564 = vpack.c.bf16 %v465, %v465
        %v565 = vld [vmem:[%s4] sm:$0xf]
        %v566 = vld [vmem:[%s4 + $0x4] sm:$0xf]
        %v567 = vpack.c.bf16 %v509, %v509
        %v570 = vunpack.c.l.b16 %v565
        %v571 = vunpack.c.l.b16 %v566
        %v572 = vpack.c.b16 %v571, %v570
        %vm573 = vcmask 64512
        %v575 = vsel %vm573, %v572, 0
        %vm577 = vcmask 1043456
        %v579 = vsel %vm577, %v567, 0
        %581 = vmatprep.subr.bf16.mxu0 0
        %582 = vmatpush1.bf16.msra.mxu0 %v579
        %583 = vmatprep.subr.bf16.mxu0 0
        %584 = vmatpush1.bf16.msra.mxu0 0
        %585 = vmatprep.subr.bf16.mxu0 0
        %586 = vmatpush1.bf16.msra.mxu0 0
        %587 = vmatprep.subr.bf16.mxu0 0
        %588 = vmatpush1.bf16.msra.mxu0 0
        %589 = vmatprep.subr.bf16.mxu0 0
        %590 = vmatpush1.bf16.msra.mxu0 0
        %591 = vmatprep.subr.bf16.mxu0 0
        %592 = vmatpush1.bf16.msra.mxu0 0
        %593 = vmatprep.subr.bf16.mxu0 0
        %594 = vmatpush1.bf16.msra.mxu0 0
        %595 = vmatprep.subr.bf16.mxu0 0
        %596 = vmatpush1.bf16.msra.mxu0 0
        %597 = vmatprep.subr.bf16.mxu0 0
        %598 = vmatpush1.bf16.msra.mxu0 0
        %599 = vmatprep.subr.bf16.mxu0 0
        %600 = vmatpush1.bf16.msra.mxu0 0
        %601 = vmatprep.subr.bf16.mxu0 0
        %602 = vmatpush1.bf16.msra.mxu0 0
        %603 = vmatprep.subr.bf16.mxu0 0
        %604 = vmatpush1.bf16.msra.mxu0 0
        %605 = vmatprep.subr.bf16.mxu0 0
        %606 = vmatpush1.bf16.msra.mxu0 0
        %607 = vmatprep.subr.bf16.mxu0 0
        %608 = vmatpush1.bf16.msra.mxu0 0
        %609 = vmatprep.subr.bf16.mxu0 0
        %610 = vmatpush1.bf16.msra.mxu0 0
        %611 = vmatprep.subr.bf16.mxu0 0
        %612 = vmatpush1.bf16.msra.mxu0 0
        %613 = vmatprep.mubr.bf16.mxu0 0
        %614 = vmatmul.mubr.bf16.gmra.mrb[0].mxu0 %v575
        %v615 = vpop.f32.mrb[0].mxu0
        %v616 = vadd.f32 0.0, %v615
        %v617 = vpop.f32.mrb[0].mxu0
        %v618 = vpop.f32.mrb[0].mxu0
        %v619 = vadd.f32 0.0, %v618
        %v620 = vpop.f32.mrb[0].mxu0
        %621 = vdwg.mxu0
        %v622 = vstv %s559
        %v623 = vmul.f32 %v622, %v616
        %v624 = vmul.f32 %v622, %v619
        %v627 = vunpack.c.l.b16 %v562
        %v628 = vunpack.c.l.b16 %v563
        %v629 = vpack.c.b16 %v628, %v627
        %v631 = vsel %vm573, %v629, 0
        %v634 = vsel %vm577, %v564, 0
        %636 = vmatprep.subr.bf16.mxu0 0
        %637 = vmatpush1.bf16.msra.mxu0 %v634
        %638 = vmatprep.subr.bf16.mxu0 0
        %639 = vmatpush1.bf16.msra.mxu0 0
        %640 = vmatprep.subr.bf16.mxu0 0
        %641 = vmatpush1.bf16.msra.mxu0 0
        %642 = vmatprep.subr.bf16.mxu0 0
        %643 = vmatpush1.bf16.msra.mxu0 0
        %644 = vmatprep.subr.bf16.mxu0 0
        %645 = vmatpush1.bf16.msra.mxu0 0
        %646 = vmatprep.subr.bf16.mxu0 0
        %647 = vmatpush1.bf16.msra.mxu0 0
        %648 = vmatprep.subr.bf16.mxu0 0
        %649 = vmatpush1.bf16.msra.mxu0 0
        %650 = vmatprep.subr.bf16.mxu0 0
        %651 = vmatpush1.bf16.msra.mxu0 0
        %652 = vmatprep.subr.bf16.mxu0 0
        %653 = vmatpush1.bf16.msra.mxu0 0
        %654 = vmatprep.subr.bf16.mxu0 0
        %655 = vmatpush1.bf16.msra.mxu0 0
        %656 = vmatprep.subr.bf16.mxu0 0
        %657 = vmatpush1.bf16.msra.mxu0 0
        %658 = vmatprep.subr.bf16.mxu0 0
        %659 = vmatpush1.bf16.msra.mxu0 0
        %660 = vmatprep.subr.bf16.mxu0 0
        %661 = vmatpush1.bf16.msra.mxu0 0
        %662 = vmatprep.subr.bf16.mxu0 0
        %663 = vmatpush1.bf16.msra.mxu0 0
        %664 = vmatprep.subr.bf16.mxu0 0
        %665 = vmatpush1.bf16.msra.mxu0 0
        %666 = vmatprep.subr.bf16.mxu0 0
        %667 = vmatpush1.bf16.msra.mxu0 0
        %668 = vmatprep.mubr.bf16.mxu0 0
        %669 = vmatmul.mubr.bf16.gmra.mrb[0].mxu0 %v631
        %v670 = vpop.f32.mrb[0].mxu0
        %v671 = vadd.f32 %v623, %v670
        %v672 = vpop.f32.mrb[0].mxu0
        %v673 = vpop.f32.mrb[0].mxu0
        %v674 = vadd.f32 %v624, %v673
        %v675 = vpop.f32.mrb[0].mxu0
        %676 = vdwg.mxu0
        %v677 = vld [vmem:[%s5] sm:$0xf]
        %v678 = vld [vmem:[%s5 + $0x4] sm:$0xf]
        %v679 = vpack.c.bf16 %v553, %v553
        %v682 = vunpack.c.l.b16 %v677
        %v683 = vunpack.c.l.b16 %v678
        %v684 = vpack.c.b16 %v683, %v682
        %v686 = vsel %vm573, %v684, 0
        %v689 = vsel %vm577, %v679, 0
        %691 = vmatprep.subr.bf16.mxu0 0
        %692 = vmatpush1.bf16.msra.mxu0 %v689
        %693 = vmatprep.subr.bf16.mxu0 0
        %694 = vmatpush1.bf16.msra.mxu0 0
        %695 = vmatprep.subr.bf16.mxu0 0
        %696 = vmatpush1.bf16.msra.mxu0 0
        %697 = vmatprep.subr.bf16.mxu0 0
        %698 = vmatpush1.bf16.msra.mxu0 0
        %699 = vmatprep.subr.bf16.mxu0 0
        %700 = vmatpush1.bf16.msra.mxu0 0
        %701 = vmatprep.subr.bf16.mxu0 0
        %702 = vmatpush1.bf16.msra.mxu0 0
        %703 = vmatprep.subr.bf16.mxu0 0
        %704 = vmatpush1.bf16.msra.mxu0 0
        %705 = vmatprep.subr.bf16.mxu0 0
        %706 = vmatpush1.bf16.msra.mxu0 0
        %707 = vmatprep.subr.bf16.mxu0 0
        %708 = vmatpush1.bf16.msra.mxu0 0
        %709 = vmatprep.subr.bf16.mxu0 0
        %710 = vmatpush1.bf16.msra.mxu0 0
        %711 = vmatprep.subr.bf16.mxu0 0
        %712 = vmatpush1.bf16.msra.mxu0 0
        %713 = vmatprep.subr.bf16.mxu0 0
        %714 = vmatpush1.bf16.msra.mxu0 0
        %715 = vmatprep.subr.bf16.mxu0 0
        %716 = vmatpush1.bf16.msra.mxu0 0
        %717 = vmatprep.subr.bf16.mxu0 0
        %718 = vmatpush1.bf16.msra.mxu0 0
        %719 = vmatprep.subr.bf16.mxu0 0
        %720 = vmatpush1.bf16.msra.mxu0 0
        %721 = vmatprep.subr.bf16.mxu0 0
        %722 = vmatpush1.bf16.msra.mxu0 0
        %723 = vmatprep.mubr.bf16.mxu0 0
        %724 = vmatmul.mubr.bf16.gmra.mrb[0].mxu0 %v686
        %v725 = vpop.f32.mrb[0].mxu0
        %v726 = vadd.f32 0.0, %v725
        %v727 = vpop.f32.mrb[0].mxu0
        %v728 = vpop.f32.mrb[0].mxu0
        %v729 = vadd.f32 0.0, %v728
        %v730 = vpop.f32.mrb[0].mxu0
        %731 = vdwg.mxu0
        %v732 = vstv %s561
        %v733 = vmul.f32 %v732, %v726
        %v734 = vmul.f32 %v732, %v729
        %v735 = vadd.f32 %v671, %v733
        %v736 = vadd.f32 %v674, %v734
        %v737 = vpack.c.bf16 %v736, %v735
        %v739 = vunpack.c.l.b16 %v737
        %v740 = vunpack.c.h.b16 %v737
        %v741 = vpack.c.b16 %v739, %v739
        %v742 = vpack.c.b16 %v740, %v740
        %vm745 = vcmask 257024
        %746 = vst.msk [vmem:[%s408] sm:$0xf] %vm745, %v741
        %747 = vst.msk [vmem:[%s408 + $0x4] sm:$0xf] %vm745, %v742
        %s748 = sand.u32 %s229, 1
        %s749 = scalar_lea.sflag [#allocation4], %s748
        %s750 = sand.u32 %s229, 1
        %s751 = smul.addr %s750, 8
        %s752 = scalar_lea.vmem [#allocation8], %s751
        // Predicated region
        $region61: #{tpu_custom_call.1} parent=47 // pred_check
          %p753 = pneg %p239
        $region62: #{tpu_custom_call.1} parent=47 // pred_check_branch
          %755 = sbr.rel (%p753) target = $region64
        $region63: #{tpu_custom_call.1} parent=47 // pred_region
          %s756 = smul.u32 2, %s32
          %s758 = ssub.s32 128, 128
          %759 = vsyncadd %s749, %s758
          %s760 = smul.addr %s31, 4
          %s761 = sadd.s32 %s756, %s760
          %s762 = smul.addr %s761, 64
          %s763 = scalar_lea.hbm %s7, %s762
          %s764 = sshll.u32 %s752, 4
          %s765 = int_to_ptr.vmem [resolvable:$true] %s764
          %770 = dma.vmem_to_hbm [thread:$0]  %s765, 128, %s763, %s749, 64, 64, 4
        $region64: #{tpu_custom_call.1} parent=47 // pred_fallthru
          _
      $region48: #{tpu_custom_call.1} parent=5 // pred_fallthru
        _
      %p771 = scmp.le.s32.totalorder 2, %s22
      // Predicated region
      $region65: #{tpu_custom_call.1} parent=5 // pred_check
        %p772 = pneg %p771
      $region66: #{tpu_custom_call.1} parent=5 // pred_check_branch
        %774 = sbr.rel (%p772) target = $region68
      $region67: #{tpu_custom_call.1} parent=5 // pred_region
        %s775 = ssub.s32 %s22, 2
        // Predicated region
        $region69: #{tpu_custom_call.1} parent=67 // pred_check
          %p776 = pneg %p245
        $region70: #{tpu_custom_call.1} parent=67 // pred_check_branch
          %778 = sbr.rel (%p776) target = $region72
        $region71: #{tpu_custom_call.1} parent=67 // pred_region
          %s779 = sand.u32 %s230, 1
          %s780 = scalar_lea.sflag [#allocation4], %s779
          %s781 = sand.u32 %s230, 1
          %s782 = smul.addr %s781, 8
          %s783 = scalar_lea.vmem [#allocation8], %s782
          %784 = dma.done %s780, 128
        $region72: #{tpu_custom_call.1} parent=67 // pred_fallthru
          _
      $region68: #{tpu_custom_call.1} parent=5 // pred_fallthru
        _
    $region6: #{tpu_custom_call.1} parent=1 // loop_footer
      %s26 = sadd.s32 1, %s22
    $region7: #{tpu_custom_call.1} parent=1 // loop_footer_branch
      %21 = sbr.rel target = $region3
    $region8: #{tpu_custom_call.1} parent=1 // loop_exit
      _
    %785 = vsyncpa [#allocation3], 1
    %s786 = scalar_lea.sflag [#allocation3], 1
    %787 = vsyncpa %s786, 1
    %788 = vsyncpa [#allocation6], 1
    %s789 = scalar_lea.sflag [#allocation6], 1
    %790 = vsyncpa %s789, 1
    %791 = vsyncpa [#allocation4], 1
    %s792 = scalar_lea.sflag [#allocation4], 1
    %793 = vsyncpa %s792, 1

</llo_original>
